<compile_context>
chip_gen: v5e
topology: v5e:2x2
jax: 0.10.0
libtpu: 0.0.40
codegen_flags: <defaults>
</compile_context>

<pallas_src>
import math
from types import SimpleNamespace

import jax
import jax.numpy as jnp
from jax import lax
from jax.experimental import pallas as pl
from jax.experimental.pallas import tpu as pltpu

NEG = -1e30       # sentinel score for boxes removed by the small-size filter / padding
BLOCK_M = 128     # lane-dense block width for the decode kernel grid

# ----------------------------------------------------------------------------
# Anchor generation (deterministic, replaces the undefined `get_anchor` global)
# ----------------------------------------------------------------------------
ANCHOR_SHAPE = [(64.0, 64.0)]  # single (w, h) anchor per feature cell (A = 1)
FEAT_STRIDE = 16.0


def get_anchor(anchor_shape, feat_h, feat_w):
    """Anchors in (x1, y1, x2, y2), y-major order (matches permute(0,2,3,1).view(-1,4))."""
    w, h = anchor_shape[0]
    ys = (jnp.arange(feat_h, dtype=jnp.float32) + 0.5) * FEAT_STRIDE
    xs = (jnp.arange(feat_w, dtype=jnp.float32) + 0.5) * FEAT_STRIDE
    cy, cx = jnp.meshgrid(ys, xs, indexing="ij")
    x1 = cx - 0.5 * (w - 1.0)
    y1 = cy - 0.5 * (h - 1.0)
    x2 = cx + 0.5 * (w - 1.0)
    y2 = cy + 0.5 * (h - 1.0)
    return jnp.stack(
        [x1.reshape(-1), y1.reshape(-1), x2.reshape(-1), y2.reshape(-1)], axis=1
    )  # (M, 4)


# ----------------------------------------------------------------------------
# Kernel 1: proposal decode + clip + small-box score masking (gridded over M)
#   params (SMEM, scalar-prefetch) : [img_h, img_w, min_size_eff]
#   anc_off : (8, BLOCK_M)  rows [x1, y1, x2, y2, dx, dy, dw, dh]
#   scores  : (1, BLOCK_M)
#   out     : (8, BLOCK_M)  rows [px1, py1, px2, py2, masked_score, 0, 0, 0]
# ----------------------------------------------------------------------------
def _decode_kernel(params_ref, anc_off_ref, sc_ref, out_ref):
    img_h = params_ref[0]
    img_w = params_ref[1]
    min_size = params_ref[2]

    ao = anc_off_ref[...]              # (8, B)
    a = ao[0:4, :]                     # anchors  (4, B)
    o = ao[4:8, :]                     # offsets  (4, B)

    wh = a[2:4, :] - a[0:2, :] + 1.0   # (2, B): [w; h]
    ctr = a[0:2, :] + 0.5 * wh         # (2, B): [cx; cy]

    nctr = o[0:2, :] * wh + ctr        # (2, B)
    nwh = jnp.exp(o[2:4, :]) * wh      # (2, B)   # TODO(synk): reference has no dw/dh clamp

    p_lo = nctr - 0.5 * nwh            # (2, B): [px1; py1]
    p_hi = nctr + 0.5 * nwh            # (2, B): [px2; py2]

    # _clip_proposal: row 0 (x) -> [0, img_w-1], row 1 (y) -> [0, img_h-1]
    is_x = lax.broadcasted_iota(jnp.int32, p_lo.shape, 0) == 0
    lim = jnp.where(is_x, img_w - 1.0, img_h - 1.0)
    p_lo = jnp.clip(p_lo, 0.0, lim)
    p_hi = jnp.clip(p_hi, 0.0, lim)

    # _del_small_idx expressed as score masking (dynamic gather not expressible here)
    size = p_hi - p_lo + 1.0
    valid = (size[0:1, :] > min_size) & (size[1:2, :] > min_size)

    out_ref[0:2, :] = p_lo
    out_ref[2:4, :] = p_hi
    out_ref[4:5, :] = jnp.where(valid, sc_ref[...], NEG)
    out_ref[5:8, :] = jnp.zeros((3, p_lo.shape[1]), jnp.float32)


def decode_clip_filter(params, anc_off, scores_2d):
    m_pad = anc_off.shape[1]
    grid = (m_pad // BLOCK_M,)
    return pl.pallas_call(
        _decode_kernel,
        out_shape=jax.ShapeDtypeStruct((8, m_pad), jnp.float32),
        grid_spec=pltpu.PrefetchScalarGridSpec(
            num_scalar_prefetch=1,
            grid=grid,
            in_specs=[
                pl.BlockSpec((8, BLOCK_M), lambda i, p: (0, i)),
                pl.BlockSpec((1, BLOCK_M), lambda i, p: (0, i)),
            ],
            out_specs=pl.BlockSpec((8, BLOCK_M), lambda i, p: (0, i)),
        ),
        compiler_params=pltpu.CompilerParams(
            dimension_semantics=("parallel",)  # megacore-shard the M axis (v7x)
        ),
    )(params, anc_off, scores_2d)


# ----------------------------------------------------------------------------
# Kernel 2: greedy NMS on the topn (score-descending) boxes.
#   params (SMEM): [nms_threshold]
#   pk  : (8, K)  rows [x1, y1, x2, y2, masked_score, 0, 0, 0]   (lane-major boxes)
#   b   : (K, 4)  same boxes, sublane-major (column broadcasts)
#   out : keep mask (1, K) float32 (1.0 keep / 0.0 suppressed or invalid)
# Scratch: (K, K) 0/1 suppress matrix (divides / compares hoisted out of the loop).
# TODO(synk): for production topn (2000+), tile the (K,K) suppress matrix over column
#             blocks (and/or store it as int8) to fit v5e's 16 MiB / v7x's 64 MiB VMEM.
# ----------------------------------------------------------------------------
def _nms_kernel(params_ref, pk_ref, b_ref, keep_ref, sup_scr):
    thr = params_ref[0]
    pk = pk_ref[...]                    # (8, K)
    b = b_ref[...]                      # (K, 4)
    k = b.shape[0]

    x1r, y1r, x2r, y2r = pk[0:1, :], pk[1:2, :], pk[2:3, :], pk[3:4, :]   # (1, K)
    sc = pk[4:5, :]                                                       # (1, K)
    x1c, y1c, x2c, y2c = b[:, 0:1], b[:, 1:2], b[:, 2:3], b[:, 3:4]       # (K, 1)

    area_r = (x2r - x1r + 1.0) * (y2r - y1r + 1.0)   # (1, K)
    area_c = (x2c - x1c + 1.0) * (y2c - y1c + 1.0)   # (K, 1)

    iw = jnp.maximum(jnp.minimum(x2c, x2r) - jnp.maximum(x1c, x1r) + 1.0, 0.0)
    ih = jnp.maximum(jnp.minimum(y2c, y2r) - jnp.maximum(y1c, y1r) + 1.0, 0.0)
    inter = iw * ih                                   # (K, K): [i sublanes, j lanes]
    union = area_c + area_r - inter

    # S[i, j] = 1  iff  box i would suppress box j  (iou > thr, j after i).
    # iou > thr  <=>  inter > thr * union  (union >= 1): no division needed.
    row_i = lax.broadcasted_iota(jnp.int32, (k, k), 0)
    col_j = lax.broadcasted_iota(jnp.int32, (k, k), 1)
    sup_scr[...] = jnp.where((inter > thr * union) & (col_j > row_i), 1.0, 0.0)

    idx = lax.broadcasted_iota(jnp.int32, (1, k), 1)
    keep0 = jnp.where(sc > NEG * 0.5, 1.0, 0.0)       # padded/filtered boxes start dead

    # Serial greedy pass. Per iteration: one dynamic sublane row load from the precomputed
    # suppress matrix, one keep-bit lookup, one select. The keep-bit lookup stays a masked
    # max (XLU) rather than a dynamic lane slice, which is the lowering-safe choice here.
    def body(i, keep):
        srow = sup_scr[pl.ds(i, 1), :]                        # (1, K)
        keep_i = jnp.max(jnp.where(idx == i, keep, 0.0))      # is box i still alive?
        return jnp.where((keep_i > 0.5) & (srow > 0.5), 0.0, keep)

    keep = lax.fori_loop(0, k, body, keep0, unroll=8)
    keep_ref[...] = keep


def nms(params, packed_t, boxes):
    k = packed_t.shape[1]
    return pl.pallas_call(
        _nms_kernel,
        out_shape=jax.ShapeDtypeStruct((1, k), jnp.float32),
        in_specs=[
            pl.BlockSpec(memory_space=pltpu.MemorySpace.SMEM),
            pl.BlockSpec(memory_space=pltpu.MemorySpace.VMEM),
            pl.BlockSpec(memory_space=pltpu.MemorySpace.VMEM),
        ],
        out_specs=pl.BlockSpec(memory_space=pltpu.MemorySpace.VMEM),
        scratch_shapes=[pltpu.VMEM((k, k), jnp.float32)],
    )(params, packed_t, boxes)


# ----------------------------------------------------------------------------
# ProposalLayer.forward
# ----------------------------------------------------------------------------
def proposal_layer(cls_prob, loc_offset, im_info, args):
    _, _, feat_h, feat_w = loc_offset.shape
    m = feat_h * feat_w                       # A = 1 anchor per cell
    m_pad = ((m + BLOCK_M - 1) // BLOCK_M) * BLOCK_M

    # glue: anchors + layout shuffles (coordinate-major, box index on lanes)
    anchors = get_anchor(ANCHOR_SHAPE, feat_h, feat_w)                 # (M, 4)
    anchors_t = jnp.transpose(anchors).astype(jnp.float32)             # (4, M)
    # permute(0,2,3,1).view(-1,4) with N=1, A=1  ==  reshape(4, H*W) in coord-major layout
    offsets_t = loc_offset[0].reshape(4, m).astype(jnp.float32)        # (4, M)
    scores_2d = cls_prob[:, 0].reshape(1, m).astype(jnp.float32)       # (1, M)

    anc_off = jnp.concatenate([anchors_t, offsets_t], axis=0)          # (8, M)
    if m_pad > m:
        anc_off = jnp.pad(anc_off, ((0, 0), (0, m_pad - m)))
        scores_2d = jnp.pad(scores_2d, ((0, 0), (0, m_pad - m)), constant_values=NEG)

    min_size_eff = args.min_size * jnp.maximum(im_info[-2], im_info[-1])
    dec_params = jnp.stack([im_info[0], im_info[1], min_size_eff]).astype(jnp.float32)

    packed = decode_clip_filter(dec_params, anc_off, scores_2d)        # (8, m_pad)
    scores_flat = packed[4]                                            # (m_pad,)

    # glue: top-k selection (replaces full descending argsort + gathers)
    topn = min(args.topn, m_pad)
    scores_topk, top_idx = lax.top_k(scores_flat, topn)                # (topn,), (topn,)
    top_vals = jnp.take(packed, top_idx, axis=1)                       # (8, topn)

    # pad candidate count to a lane-dense multiple of 128 for the NMS kernel
    k_pad = ((topn + 127) // 128) * 128
    boxes_t = top_vals[0:4]                                            # (4, topn)
    sc_row = top_vals[4:5]                                             # (1, topn)
    if k_pad > topn:
        boxes_t = jnp.pad(boxes_t, ((0, 0), (0, k_pad - topn)))
        sc_row = jnp.pad(sc_row, ((0, 0), (0, k_pad - topn)), constant_values=NEG)
    pk = jnp.concatenate([boxes_t, sc_row, jnp.zeros((3, k_pad), jnp.float32)], axis=0)
    boxes_cols = jnp.transpose(boxes_t)                                # (k_pad, 4)

    nms_params = jnp.array([args.nms_threshold], dtype=jnp.float32)
    keep = nms(nms_params, pk, boxes_cols)[0, :topn] > 0.5             # (topn,)

    # glue: take the first post_topn kept boxes (kept order == score-descending order)
    # via cumsum prefix compaction + scatter (replaces the argsort-of-positions trick).
    # TODO(synk): torch returns variable-length proposal[mask]; emulated with fixed-size
    #             padded outputs plus an explicit valid count (dynamic shapes not expressible).
    post_topn = args.post_topn
    keep_i32 = keep.astype(jnp.int32)
    rank = jnp.cumsum(keep_i32) - keep_i32                             # output slot per kept box
    slot = jnp.where(keep, rank, post_topn)                            # OOB slots get dropped
    prop_out = jnp.zeros((post_topn, 4), jnp.float32).at[slot].set(
        boxes_cols[:topn], mode="drop")
    score_out = jnp.zeros((post_topn,), jnp.float32).at[slot].set(
        scores_topk, mode="drop")
    num_valid = jnp.minimum(jnp.sum(keep_i32), post_topn)
    return prop_out, score_out, num_valid


if __name__ == "__main__":
    key = jax.random.PRNGKey(0)
    k1, k2 = jax.random.split(key)

    H = W = 16
    cls_prob = jax.random.uniform(k1, (1, 2, H, W), dtype=jnp.float32)
    loc_offset = jax.random.normal(k2, (1, 4, H, W), dtype=jnp.float32) * 0.1
    im_info = jnp.array([256.0, 256.0, 1.0, 1.0], dtype=jnp.float32)
    args = SimpleNamespace(min_size=8.0, topn=128, nms_threshold=0.7, post_topn=32)

    proposals, scores, num_valid = proposal_layer(cls_prob, loc_offset, im_info, args)
    jax.block_until_ready((proposals, scores, num_valid))

    assert proposals.shape == (args.post_topn, 4)
    assert scores.shape == (args.post_topn,)
    print("KERNEL_OK")
</pallas_src>

<mosaic_0001>
module attributes {stable_mosaic.version = 11 : i64} {
  func.func @_decode_kernel(%arg0: i32, %arg1: memref<3xf32, #tpu.memory_space<smem>>, %arg2: memref<8x128xf32, #tpu.memory_space<vmem>>, %arg3: memref<1x128xf32, #tpu.memory_space<vmem>>, %arg4: memref<8x128xf32, #tpu.memory_space<vmem>>) attributes {dimension_semantics = [#tpu.dimension_semantics<parallel>], iteration_bounds = array<i64: 2>, scalar_prefetch = 1 : i64, scratch_operands = 0 : i64, tpu.core_type = #tpu.core_type<tc>, window_params = [{transform_indices = @transform_0, window_bounds = array<i64: 8, 128>}, {transform_indices = @transform_1, window_bounds = array<i64: 1, 128>}, {transform_indices = @transform_2, window_bounds = array<i64: 8, 128>}]} {
    %c0 = arith.constant 0 : index
    %0 = memref.load %arg1[%c0] : memref<3xf32, #tpu.memory_space<smem>>
    %c1 = arith.constant 1 : index
    %1 = memref.load %arg1[%c1] : memref<3xf32, #tpu.memory_space<smem>>
    %c2 = arith.constant 2 : index
    %2 = memref.load %arg1[%c2] : memref<3xf32, #tpu.memory_space<smem>>
    %c0_0 = arith.constant 0 : index
    %c0_1 = arith.constant 0 : index
    %3 = vector.load %arg2[%c0_0, %c0_1] : memref<8x128xf32, #tpu.memory_space<vmem>>, vector<8x128xf32>
    %4 = vector.extract_strided_slice %3 {offsets = [0, 0], sizes = [4, 128], strides = [1, 1]} : vector<8x128xf32> to vector<4x128xf32>
    %5 = vector.extract_strided_slice %3 {offsets = [4, 0], sizes = [4, 128], strides = [1, 1]} : vector<8x128xf32> to vector<4x128xf32>
    %6 = vector.extract_strided_slice %4 {offsets = [2, 0], sizes = [2, 128], strides = [1, 1]} : vector<4x128xf32> to vector<2x128xf32>
    %7 = vector.extract_strided_slice %4 {offsets = [0, 0], sizes = [2, 128], strides = [1, 1]} : vector<4x128xf32> to vector<2x128xf32>
    %8 = arith.subf %6, %7 : vector<2x128xf32>
    %cst = arith.constant 1.000000e+00 : f32
    %9 = vector.broadcast %cst : f32 to vector<2x128xf32>
    %10 = arith.addf %8, %9 : vector<2x128xf32>
    %11 = vector.extract_strided_slice %4 {offsets = [0, 0], sizes = [2, 128], strides = [1, 1]} : vector<4x128xf32> to vector<2x128xf32>
    %cst_2 = arith.constant 5.000000e-01 : f32
    %12 = vector.broadcast %cst_2 : f32 to vector<2x128xf32>
    %13 = arith.mulf %12, %10 : vector<2x128xf32>
    %14 = arith.addf %11, %13 : vector<2x128xf32>
    %15 = vector.extract_strided_slice %5 {offsets = [0, 0], sizes = [2, 128], strides = [1, 1]} : vector<4x128xf32> to vector<2x128xf32>
    %16 = arith.mulf %15, %10 : vector<2x128xf32>
    %17 = arith.addf %16, %14 : vector<2x128xf32>
    %18 = vector.extract_strided_slice %5 {offsets = [2, 0], sizes = [2, 128], strides = [1, 1]} : vector<4x128xf32> to vector<2x128xf32>
    %19 = math.exp %18 : vector<2x128xf32>
    %20 = arith.mulf %19, %10 : vector<2x128xf32>
    %cst_3 = arith.constant 5.000000e-01 : f32
    %21 = vector.broadcast %cst_3 : f32 to vector<2x128xf32>
    %22 = arith.mulf %21, %20 : vector<2x128xf32>
    %23 = arith.subf %17, %22 : vector<2x128xf32>
    %cst_4 = arith.constant 5.000000e-01 : f32
    %24 = vector.broadcast %cst_4 : f32 to vector<2x128xf32>
    %25 = arith.mulf %24, %20 : vector<2x128xf32>
    %26 = arith.addf %17, %25 : vector<2x128xf32>
    %27 = tpu.iota {dimensions = array<i32: 0>} : vector<2x128xi32>
    %c0_i32 = arith.constant 0 : i32
    %28 = vector.broadcast %c0_i32 : i32 to vector<2x128xi32>
    %29 = arith.cmpi eq, %27, %28 : vector<2x128xi32>
    %cst_5 = arith.constant 1.000000e+00 : f32
    %30 = arith.subf %1, %cst_5 : f32
    %cst_6 = arith.constant 1.000000e+00 : f32
    %31 = arith.subf %0, %cst_6 : f32
    %32 = vector.broadcast %30 : f32 to vector<2x128xf32>
    %33 = vector.broadcast %31 : f32 to vector<2x128xf32>
    %34 = arith.select %29, %32, %33 : vector<2x128xi1>, vector<2x128xf32>
    %cst_7 = arith.constant 0.000000e+00 : f32
    %35 = vector.broadcast %cst_7 : f32 to vector<2x128xf32>
    %36 = arith.maximumf %35, %23 : vector<2x128xf32>
    %37 = arith.minimumf %34, %36 : vector<2x128xf32>
    %cst_8 = arith.constant 0.000000e+00 : f32
    %38 = vector.broadcast %cst_8 : f32 to vector<2x128xf32>
    %39 = arith.maximumf %38, %26 : vector<2x128xf32>
    %40 = arith.minimumf %34, %39 : vector<2x128xf32>
    %41 = arith.subf %40, %37 : vector<2x128xf32>
    %cst_9 = arith.constant 1.000000e+00 : f32
    %42 = vector.broadcast %cst_9 : f32 to vector<2x128xf32>
    %43 = arith.addf %41, %42 : vector<2x128xf32>
    %44 = vector.extract_strided_slice %43 {offsets = [0, 0], sizes = [1, 128], strides = [1, 1]} : vector<2x128xf32> to vector<1x128xf32>
    %45 = vector.broadcast %2 : f32 to vector<1x128xf32>
    %46 = arith.cmpf ogt, %44, %45 : vector<1x128xf32>
    %47 = vector.extract_strided_slice %43 {offsets = [1, 0], sizes = [1, 128], strides = [1, 1]} : vector<2x128xf32> to vector<1x128xf32>
    %48 = vector.broadcast %2 : f32 to vector<1x128xf32>
    %49 = arith.cmpf ogt, %47, %48 : vector<1x128xf32>
    %50 = arith.andi %46, %49 : vector<1x128xi1>
    %c0_10 = arith.constant 0 : index
    %c0_11 = arith.constant 0 : index
    %51 = vector.load %arg4[%c0_10, %c0_11] : memref<8x128xf32, #tpu.memory_space<vmem>>, vector<2x128xf32>
    tpu.vector_store %arg4[%c0_10, %c0_11], %37 {strides = array<i32>} : memref<8x128xf32, #tpu.memory_space<vmem>>, vector<2x128xf32>,
    %c2_12 = arith.constant 2 : index
    %c0_13 = arith.constant 0 : index
    %52 = vector.load %arg4[%c2_12, %c0_13] : memref<8x128xf32, #tpu.memory_space<vmem>>, vector<2x128xf32>
    tpu.vector_store %arg4[%c2_12, %c0_13], %40 {strides = array<i32>} : memref<8x128xf32, #tpu.memory_space<vmem>>, vector<2x128xf32>,
    %c0_14 = arith.constant 0 : index
    %c0_15 = arith.constant 0 : index
    %53 = vector.load %arg3[%c0_14, %c0_15] : memref<1x128xf32, #tpu.memory_space<vmem>>, vector<1x128xf32>
    %cst_16 = arith.constant -1.000000e+30 : f32
    %54 = vector.broadcast %cst_16 : f32 to vector<1x128xf32>
    %55 = arith.select %50, %53, %54 : vector<1x128xi1>, vector<1x128xf32>
    %c4 = arith.constant 4 : index
    %c0_17 = arith.constant 0 : index
    %56 = vector.load %arg4[%c4, %c0_17] : memref<8x128xf32, #tpu.memory_space<vmem>>, vector<1x128xf32>
    tpu.vector_store %arg4[%c4, %c0_17], %55 {strides = array<i32>} : memref<8x128xf32, #tpu.memory_space<vmem>>, vector<1x128xf32>,
    %cst_18 = arith.constant 0.000000e+00 : f32
    %57 = vector.broadcast %cst_18 : f32 to vector<3x128xf32>
    %c5 = arith.constant 5 : index
    %c0_19 = arith.constant 0 : index
    %58 = vector.load %arg4[%c5, %c0_19] : memref<8x128xf32, #tpu.memory_space<vmem>>, vector<3x128xf32>
    tpu.vector_store %arg4[%c5, %c0_19], %57 {strides = array<i32>} : memref<8x128xf32, #tpu.memory_space<vmem>>, vector<3x128xf32>,
    return
  }
  func.func @transform_0(%arg0: i32, %arg1: memref<3xf32, #tpu.memory_space<smem>>) -> (i32, i32) {
    %c0_i32 = arith.constant 0 : i32
    %c0_i32_0 = arith.constant 0 : i32
    return %c0_i32, %arg0 : i32, i32
  }
  func.func @transform_1(%arg0: i32, %arg1: memref<3xf32, #tpu.memory_space<smem>>) -> (i32, i32) {
    %c0_i32 = arith.constant 0 : i32
    %c0_i32_0 = arith.constant 0 : i32
    return %c0_i32, %arg0 : i32, i32
  }
  func.func @transform_2(%arg0: i32, %arg1: memref<3xf32, #tpu.memory_space<smem>>) -> (i32, i32) {
    %c0_i32 = arith.constant 0 : i32
    %c0_i32_0 = arith.constant 0 : i32
    return %c0_i32, %arg0 : i32, i32
  }
}

</mosaic_0001>

<llo_original>
// kernel: tpu_custom_call.1
$region0: #{tpu_custom_call.1}
  #allocation0 [shape = 'u32[]', space=smem, size = 0x4, offset = 0x4, fixed_abs, tag = 'smem constant byte address 0x4 - core index']
  #allocation1 [shape = 'u32[72,128]{1,0:T(1,128)}', space=vmem, size = 0x9000, scoped, tag = 'internal scratch']
  #allocation2 [shape = 's32[1]{0}', space=sflag, size = 0x4, scoped, tag = 'scoped memory for tpu_custom_call.1']
  #allocation3 [shape = 'u8[512]{0}', space=smem, size = 0x200, scoped, tag = 'prefetched SMEM operand 0']
  %s0 = inlined_call_operand.hbm [shape: f32[3], index: 0, kind: input, shape index: {}]
  %s1 = inlined_call_operand.hbm [shape: f32[8,256], index: 1, kind: input, shape index: {}]
  %s2 = inlined_call_operand.hbm [shape: f32[1,256], index: 2, kind: input, shape index: {}]
  %s3 = inlined_call_operand.hbm [shape: f32[8,256], index: 3, kind: output, shape index: {}]
  %s4 = sld [smem:[#allocation0]]
  $region49: #{tpu_custom_call.1} parent=0
    _
  %s6 = ssub.s32 1, %s4
  %s7 = scalar_select 0, %s6, %s4
  %s9 = sshll.u32 %s0, 4
  %s10 = int_to_ptr.hbm [resolvable:$true] %s9
  %12 = dma.hbm_to_smem %s10, 16, [#allocation3], [#allocation2]
  %14 = dma.done [#allocation2], 16
  %15 = sfence
  $region1: #{tpu_custom_call.1} parent=0
    #allocation4 [shape = 'u8[8192]{0}', space=vmem, size = 0x2000, scoped, tag = 'input window, operand 1']
    #allocation5 [shape = 's32[2]{0}', space=sflag, size = 0x8, scoped, tag = 'scoped memory for tpu_custom_call.1']
    #allocation6 [shape = 's32[2]{0}', space=sflag, size = 0x8, scoped, tag = 'scoped memory for tpu_custom_call.1']
    #allocation7 [shape = 'u8[1024]{0}', space=vmem, size = 0x400, scoped, tag = 'input window, operand 2']
    #allocation8 [shape = 's32[2]{0}', space=sflag, size = 0x8, scoped, tag = 'scoped memory for tpu_custom_call.1']
    #allocation9 [shape = 'u8[8192]{0}', space=vmem, size = 0x2000, scoped, tag = 'output window, operand 0']
    %16 = vsyncpa [#allocation5], 0
    %s17 = scalar_lea.sflag [#allocation5], 1
    %18 = vsyncpa %s17, 0
    %19 = vsyncpa [#allocation8], 0
    %s20 = scalar_lea.sflag [#allocation8], 1
    %21 = vsyncpa %s20, 0
    %22 = vsyncpa [#allocation6], 0
    %s23 = scalar_lea.sflag [#allocation6], 1
    %24 = vsyncpa %s23, 0
    loop: start=0, step=1, limit=4
    $region2: #{tpu_custom_call.1} parent=1 // loop_pre_header
      _
    $region3: #{tpu_custom_call.1} parent=1 // loop_header
      %s26 = sphi 0, %s30
      %p27 = scmp.ge.s32.totalorder %s26, 4
      %s36 = sphi 0, %s38
      %s39 = sphi 0, %s36
      %s40 = sphi 0, %s39
      %s56 = sphi 0, %s40
      %s62 = sphi 0, %s64
      %s65 = sphi 0, %s62
      %s66 = sphi 0, %s65
      %s82 = sphi 0, %s66
      %s88 = sphi 0, %s90
      %s91 = sphi 0, %s88
      %s92 = sphi 0, %s91
      %s108 = sphi 0, %s92
    $region4: #{tpu_custom_call.1} parent=1 // loop_header_branch
      %29 = sbr.rel (%p27) target = $region8
    $region5: #{tpu_custom_call.1} parent=1 // loop_body
      %s31 = ssub.s32 %s26, 1
      %s32 = ssub.s32 %s26, 2
      %s33 = sadd.s32 %s26, 1
      %s34 = ssub.s32 %s26, %s33
      %p35 = scmp.eq.s32.totalorder %s34, 0
      %s37 = sadd.s32 %s36, 1
      %s38 = scalar_select %p35, %s36, %s37
      %p41 = pneg %p35
      %p42 = scmp.eq.s32.totalorder %s26, 1
      %p43 = por %p41, %p42
      %p44 = scmp.ne.s32.totalorder %s36, %s39
      %p45 = scmp.eq.s32.totalorder %s26, 0
      %p46 = por %p44, %p45
      %p47 = scmp.ne.s32.totalorder %s36, %s39
      %p48 = scmp.eq.s32.totalorder %s31, 1
      %p49 = por %p47, %p48
      %p50 = scmp.ne.s32.totalorder %s39, %s40
      %p51 = scmp.eq.s32.totalorder %s31, 0
      %p52 = por %p50, %p51
      %p53 = scmp.ne.s32.totalorder %s39, %s40
      %p54 = scmp.eq.s32.totalorder %s32, 1
      %p55 = por %p53, %p54
      %p57 = scmp.ne.s32.totalorder %s40, %s56
      %p58 = scmp.eq.s32.totalorder %s32, 0
      %p59 = por %p57, %p58
      %s60 = ssub.s32 %s26, %s33
      %p61 = scmp.eq.s32.totalorder %s60, 0
      %s63 = sadd.s32 %s62, 1
      %s64 = scalar_select %p61, %s62, %s63
      %p67 = pneg %p61
      %p68 = scmp.eq.s32.totalorder %s26, 1
      %p69 = por %p67, %p68
      %p70 = scmp.ne.s32.totalorder %s62, %s65
      %p71 = scmp.eq.s32.totalorder %s26, 0
      %p72 = por %p70, %p71
      %p73 = scmp.ne.s32.totalorder %s62, %s65
      %p74 = scmp.eq.s32.totalorder %s31, 1
      %p75 = por %p73, %p74
      %p76 = scmp.ne.s32.totalorder %s65, %s66
      %p77 = scmp.eq.s32.totalorder %s31, 0
      %p78 = por %p76, %p77
      %p79 = scmp.ne.s32.totalorder %s65, %s66
      %p80 = scmp.eq.s32.totalorder %s32, 1
      %p81 = por %p79, %p80
      %p83 = scmp.ne.s32.totalorder %s66, %s82
      %p84 = scmp.eq.s32.totalorder %s32, 0
      %p85 = por %p83, %p84
      %s86 = ssub.s32 %s26, %s33
      %p87 = scmp.eq.s32.totalorder %s86, 0
      %s89 = sadd.s32 %s88, 1
      %s90 = scalar_select %p87, %s88, %s89
      %p93 = pneg %p87
      %p94 = scmp.eq.s32.totalorder %s26, 1
      %p95 = por %p93, %p94
      %p96 = scmp.ne.s32.totalorder %s88, %s91
      %p97 = scmp.eq.s32.totalorder %s26, 0
      %p98 = por %p96, %p97
      %p99 = scmp.ne.s32.totalorder %s88, %s91
      %p100 = scmp.eq.s32.totalorder %s31, 1
      %p101 = por %p99, %p100
      %p102 = scmp.ne.s32.totalorder %s91, %s92
      %p103 = scmp.eq.s32.totalorder %s31, 0
      %p104 = por %p102, %p103
      %p105 = scmp.ne.s32.totalorder %s91, %s92
      %p106 = scmp.eq.s32.totalorder %s32, 1
      %p107 = por %p105, %p106
      %p109 = scmp.ne.s32.totalorder %s92, %s108
      %p110 = scmp.eq.s32.totalorder %s32, 0
      %p111 = por %p109, %p110
      %p112 = scmp.le.s32.totalorder 1, %s26
      %p113 = scmp.lt.s32.totalorder %s26, 3
      %p114 = pnand %p112, %p113
      %p115 = pneg %p114
      // Predicated region
      $region9: #{tpu_custom_call.1} parent=5 // pred_check
        _
      $region10: #{tpu_custom_call.1} parent=5 // pred_check_branch
        %117 = sbr.rel (%p114) target = $region12
      $region11: #{tpu_custom_call.1} parent=5 // pred_region
        %s118 = ssub.s32 %s26, 1
      $region12: #{tpu_custom_call.1} parent=5 // pred_fallthru
        _
      %p119 = scmp.lt.s32.totalorder %s26, 2
      // Predicated region
      $region13: #{tpu_custom_call.1} parent=5 // pred_check
        %p120 = pneg %p119
      $region14: #{tpu_custom_call.1} parent=5 // pred_check_branch
        %122 = sbr.rel (%p120) target = $region16
      $region15: #{tpu_custom_call.1} parent=5 // pred_region
        // Predicated region
        $region17: #{tpu_custom_call.1} parent=15 // pred_check
          %p123 = pneg %p46
        $region18: #{tpu_custom_call.1} parent=15 // pred_check_branch
          %125 = sbr.rel (%p123) target = $region20
        $region19: #{tpu_custom_call.1} parent=15 // pred_region
          %s126 = sand.u32 %s36, 1
          %s127 = scalar_lea.sflag [#allocation5], %s126
          %s128 = sand.u32 %s36, 1
          %s129 = smul.addr %s128, 8
          %s130 = scalar_lea.vmem [#allocation4], %s129
          %132 = vsyncadd %s127, 0
          %s133 = smul.addr %s26, 8
          %s134 = scalar_lea.hbm %s1, %s133
          %s136 = sshll.u32 %s134, 4
          %s137 = int_to_ptr.hbm [resolvable:$true] %s136
          %s138 = sshll.u32 %s130, 4
          %s139 = int_to_ptr.vmem [resolvable:$true] %s138
          %141 = dma.hbm_to_vmem [thread:$0]  %s137, 128, %s139, %s127
        $region20: #{tpu_custom_call.1} parent=15 // pred_fallthru
          _
        // Predicated region
        $region21: #{tpu_custom_call.1} parent=15 // pred_check
          %p142 = pneg %p72
        $region22: #{tpu_custom_call.1} parent=15 // pred_check_branch
          %144 = sbr.rel (%p142) target = $region24
        $region23: #{tpu_custom_call.1} parent=15 // pred_region
          %s145 = sand.u32 %s62, 1
          %s146 = scalar_lea.sflag [#allocation8], %s145
          %s147 = sand.u32 %s62, 1
          %s148 = scalar_lea.vmem [#allocation7], %s147
          %150 = vsyncadd %s146, 0
          %s151 = scalar_lea.hbm %s2, %s26
          %s153 = sshll.u32 %s151, 4
          %s154 = int_to_ptr.hbm [resolvable:$true] %s153
          %s155 = sshll.u32 %s148, 4
          %s156 = int_to_ptr.vmem [resolvable:$true] %s155
          %158 = dma.hbm_to_vmem [thread:$0]  %s154, 16, %s156, %s146
        $region24: #{tpu_custom_call.1} parent=15 // pred_fallthru
          _
      $region16: #{tpu_custom_call.1} parent=5 // pred_fallthru
        _
      %p159 = scmp.le.s32.totalorder 1, %s26
      %p160 = scmp.lt.s32.totalorder %s26, 3
      %p161 = pnand %p159, %p160
      %p162 = pneg %p161
      // Predicated region
      $region25: #{tpu_custom_call.1} parent=5 // pred_check
        _
      $region26: #{tpu_custom_call.1} parent=5 // pred_check_branch
        %164 = sbr.rel (%p161) target = $region28
      $region27: #{tpu_custom_call.1} parent=5 // pred_region
        %s165 = ssub.s32 %s26, 1
        %s166 = sand.u32 %s39, 1
        %s167 = scalar_lea.sflag [#allocation5], %s166
        %s168 = sand.u32 %s39, 1
        %s169 = smul.addr %s168, 8
        %s170 = scalar_lea.vmem [#allocation4], %s169
        // Predicated region
        $region29: #{tpu_custom_call.1} parent=27 // pred_check
          %p171 = pneg %p52
        $region30: #{tpu_custom_call.1} parent=27 // pred_check_branch
          %173 = sbr.rel (%p171) target = $region32
        $region31: #{tpu_custom_call.1} parent=27 // pred_region
          %175 = dma.done %s167, 128
        $region32: #{tpu_custom_call.1} parent=27 // pred_fallthru
          _
        %s176 = sand.u32 %s65, 1
        %s177 = scalar_lea.sflag [#allocation8], %s176
        %s178 = sand.u32 %s65, 1
        %s179 = scalar_lea.vmem [#allocation7], %s178
        // Predicated region
        $region33: #{tpu_custom_call.1} parent=27 // pred_check
          %p180 = pneg %p78
        $region34: #{tpu_custom_call.1} parent=27 // pred_check_branch
          %182 = sbr.rel (%p180) target = $region36
        $region35: #{tpu_custom_call.1} parent=27 // pred_region
          %184 = dma.done %s177, 16
        $region36: #{tpu_custom_call.1} parent=27 // pred_fallthru
          _
        %s185 = sand.u32 %s39, 1
        %s186 = scalar_lea.sflag [#allocation5], %s185
        %s187 = sand.u32 %s39, 1
        %s188 = smul.addr %s187, 8
        %s189 = scalar_lea.vmem [#allocation4], %s188
        %p190 = pneg %p52
        %p191 = pneg %p49
        %s192 = sand.u32 %s65, 1
        %s193 = scalar_lea.sflag [#allocation8], %s192
        %s194 = sand.u32 %s65, 1
        %s195 = scalar_lea.vmem [#allocation7], %s194
        %p196 = pneg %p78
        %p197 = pneg %p75
        %p198 = pneg %p104
        %p199 = pneg %p101
        %s200 = sand.u32 %s91, 1
        %s201 = scalar_lea.sflag [#allocation6], %s200
        %s202 = sand.u32 %s91, 1
        %s203 = smul.addr %s202, 8
        %s204 = scalar_lea.vmem [#allocation9], %s203
        %s205 = sld [smem:[#allocation3]]
        %s206 = sld [smem:[#allocation3 + $0x1]]
        %s207 = sld [smem:[#allocation3 + $0x2]]
        %v208 = vld [vmem:[%s170] sm:$0xff]
        %v210 = vrot.slane %v208, 6
        %v212 = vsub.f32 %v208, %v210
        %v213 = vadd.f32 %v212, 1.0
        %v214 = vmul.f32 %v213, 0.5
        %v216 = vrot.slane %v214, 2
        %v218 = vadd.f32 %v208, %v216
        %v220 = vrot.slane %v213, 6
        %v222 = vmul.f32 %v208, %v220
        %v224 = vrot.slane %v218, 4
        %v226 = vadd.f32 %v222, %v224
        %v227 = vmul.f32 %v208, 1.442695
        %v228 = vpow.pop %v227
        %v229 = vrot.slane %v213, 4
        %v231 = vmul.f32 %v228, %v229
        %v232 = vmul.f32 %v231, 0.5
        %v234 = vrot.slane %v232, 2
        %v236 = vsub.f32 %v226, %v234
        %v237 = vadd.f32 %v226, %v234
        %v238 = vlaneseq
        %v239 = vshrl.u32 %v238, 7
        %vm240 = vcmp.eq.s32.totalorder %v239, 0
        %s241 = ssub.f32 %s206, 1.0
        %s242 = ssub.f32 %s205, 1.0
        %v243 = vstv %s241
        %v244 = vstv %s242
        %v245 = vsel %vm240, %v243, %v244
        %v246 = vmax.f32 %v236, 0.0
        %v248 = vrot.slane %v246, 4
        %v250 = vmin.f32 %v245, %v248
        %v251 = vmax.f32 %v237, 0.0
        %v253 = vrot.slane %v251, 4
        %v255 = vmin.f32 %v245, %v253
        %v256 = vsub.f32 %v255, %v250
        %v257 = vadd.f32 %v256, 1.0
        %v258 = vstv %s207
        %vm259 = vcmp.gt.f32.partialorder %v257, %v258
        %v260 = vsel %vm259, 1, 0
        %v261 = vrot.slane %v260, 1
        %vm262 = vcmp.ne.s32.totalorder %v261, 0
        %vm263 = vmand %vm259, %vm262
        %264 = vst [vmem:[%s204] sm:$0x3] %v250
        %265 = vst [vmem:[%s204 + $0x2] sm:$0x3] %v255
        %v266 = vld [vmem:[%s179] sm:$0x1]
        %v267 = vsel %vm263, %v266, -1e+30
        %268 = vst [vmem:[%s204 + $0x4] sm:$0x1] %v267
        %269 = vst [vmem:[%s204 + $0x5] sm:$0x7] 0.0
        %s270 = sand.u32 %s91, 1
        %s271 = scalar_lea.sflag [#allocation6], %s270
        %s272 = sand.u32 %s91, 1
        %s273 = smul.addr %s272, 8
        %s274 = scalar_lea.vmem [#allocation9], %s273
        // Predicated region
        $region37: #{tpu_custom_call.1} parent=27 // pred_check
          %p275 = pneg %p101
        $region38: #{tpu_custom_call.1} parent=27 // pred_check_branch
          %277 = sbr.rel (%p275) target = $region40
        $region39: #{tpu_custom_call.1} parent=27 // pred_region
          %279 = vsyncadd %s271, 0
          %s280 = smul.addr %s31, 8
          %s281 = scalar_lea.hbm %s3, %s280
          %s283 = sshll.u32 %s274, 4
          %s284 = int_to_ptr.vmem [resolvable:$true] %s283
          %s285 = sshll.u32 %s281, 4
          %s286 = int_to_ptr.hbm [resolvable:$true] %s285
          %288 = dma.vmem_to_hbm [thread:$0]  %s284, 128, %s286, %s271
        $region40: #{tpu_custom_call.1} parent=27 // pred_fallthru
          _
      $region28: #{tpu_custom_call.1} parent=5 // pred_fallthru
        _
      %p289 = scmp.le.s32.totalorder 2, %s26
      // Predicated region
      $region41: #{tpu_custom_call.1} parent=5 // pred_check
        %p290 = pneg %p289
      $region42: #{tpu_custom_call.1} parent=5 // pred_check_branch
        %292 = sbr.rel (%p290) target = $region44
      $region43: #{tpu_custom_call.1} parent=5 // pred_region
        %s293 = ssub.s32 %s26, 2
        // Predicated region
        $region45: #{tpu_custom_call.1} parent=43 // pred_check
          %p294 = pneg %p107
        $region46: #{tpu_custom_call.1} parent=43 // pred_check_branch
          %296 = sbr.rel (%p294) target = $region48
        $region47: #{tpu_custom_call.1} parent=43 // pred_region
          %s297 = sand.u32 %s92, 1
          %s298 = scalar_lea.sflag [#allocation6], %s297
          %s299 = sand.u32 %s92, 1
          %s300 = smul.addr %s299, 8
          %s301 = scalar_lea.vmem [#allocation9], %s300
          %303 = dma.done %s298, 128
        $region48: #{tpu_custom_call.1} parent=43 // pred_fallthru
          _
      $region44: #{tpu_custom_call.1} parent=5 // pred_fallthru
        _
    $region6: #{tpu_custom_call.1} parent=1 // loop_footer
      %s30 = sadd.s32 1, %s26
    $region7: #{tpu_custom_call.1} parent=1 // loop_footer_branch
      %25 = sbr.rel target = $region3
    $region8: #{tpu_custom_call.1} parent=1 // loop_exit
      _
    %304 = vsyncpa [#allocation5], 1
    %s305 = scalar_lea.sflag [#allocation5], 1
    %306 = vsyncpa %s305, 1
    %307 = vsyncpa [#allocation8], 1
    %s308 = scalar_lea.sflag [#allocation8], 1
    %309 = vsyncpa %s308, 1
    %310 = vsyncpa [#allocation6], 1
    %s311 = scalar_lea.sflag [#allocation6], 1
    %312 = vsyncpa %s311, 1

</llo_original>
